<compile_context>
chip_gen: v6e
topology: v6e:2x2x1
jax: 0.10.0
libtpu: 0.0.40
codegen_flags: <defaults>
</compile_context>

<pallas_src>
import functools

import jax
import jax.numpy as jnp
from jax.experimental import pallas as pl
from jax.experimental.pallas import tpu as pltpu


def _round_up(x, m):
    return (x + m - 1) // m * m


def _choose_k_tile(S, max_tk=512, weight_stream_budget=24 * 2**20):
    """K (reduction) tile: multiple of 128, large enough to amortize per-step
    overhead, small enough that two double-buffered (tk, 2*S_pad) bf16 weight
    tiles stay within `weight_stream_budget` (VMEM-safe on every generation)."""
    S_128 = _round_up(S, 128)
    tk = _round_up(min(max_tk, S_128), 128)
    while tk > 128 and 2 * (tk * 2 * _round_up(S, tk) * 2) > weight_stream_budget:
        tk -= 128
    S_pad = _round_up(S, tk)
    return tk, S_pad


def _cross_attention_kernel(x_ref, h_ref, wq_ref, wkvT_ref, bkv_ref,
                            out_ref, acc_ref, *, S, C):
    # Grid: (batch-row blocks [parallel], K-reduction steps [arbitrary]).
    # x_ref:    (bb*C, tk)       f32   (cast to bf16 in-kernel for the MXU)
    # h_ref:    (bb, Hd)         f32   (Hd == C)
    # wq_ref:   (Hd+1, Hd)       f32   rows 0..Hd-1 = Wq^T, row Hd = bq
    # wkvT_ref: (tk, 2*S_pad)    bf16  K-slice of [Wk^T | Wv^T]
    # bkv_ref:  (1, 2*S_pad)     f32   [bk | bv] (zero-padded)
    # out_ref:  (bb, C)          f32
    # acc_ref:  (bb*C, 2*S_pad)  f32   fused K/V projection accumulator
    k = pl.program_id(1)
    nk = pl.num_programs(1)

    @pl.when(k == 0)
    def _init():
        acc_ref[...] = jnp.zeros_like(acc_ref)

    # Partial fused K/V projection: bf16 operands on the MXU, f32 accumulation.
    x_bf16 = x_ref[...].astype(jnp.bfloat16)
    acc_ref[...] += jnp.dot(x_bf16, wkvT_ref[...],
                            preferred_element_type=jnp.float32)

    @pl.when(k == nk - 1)
    def _epilogue():
        BC, S2 = acc_ref.shape
        S_pad = S2 // 2
        bb = BC // C

        kv = jnp.tanh(acc_ref[...] + bkv_ref[...])            # (bb*C, 2*S_pad)
        K = kv[:, :S_pad].reshape(bb, C, S_pad)
        V = kv[:, S_pad:].reshape(bb, C, S_pad)

        # Query projection on the VPU (tiny Hd x Hd); bq folded as last row.
        wq = wq_ref[...]                                       # (Hd+1, Hd)
        h = h_ref[...]                                         # (bb, Hd)
        q = jnp.tanh(jnp.sum(h[:, :, None] * wq[None, :C, :], axis=1)
                     + wq[C:, :])                              # (bb, Hd)
        q = q * (1.0 / 7.0)     # fold the /7 score scale into q (Hd elems)

        scores = jnp.sum(q[:, :, None] * K, axis=1)            # (bb, S_pad)
        # Mask zero-padded spatial lanes before the softmax.
        lane = jax.lax.broadcasted_iota(jnp.int32, scores.shape, 1)
        scores = jnp.where(lane < S, scores, jnp.float32(-1e30))

        m = jnp.max(scores, axis=1, keepdims=True)             # (bb, 1)
        e = jnp.exp(scores - m)                                # (bb, S_pad)
        l = jnp.sum(e, axis=1, keepdims=True)                  # (bb, 1)

        # Deferred normalization: weight V by the un-normalized e, then scale
        # the (bb, C) result by 1/l on the EUP (approx reciprocal).
        res = jnp.sum(V * e[:, None, :], axis=2)               # (bb, C)
        res = res * pl.reciprocal(l, approx=True)
        out_ref[...] = res.astype(out_ref.dtype)


def prepare_kernel_params(params, max_tk=512):
    """One-time weight prep (hoisted off the per-call forward path):
      * pre-transpose Wq/Wk/Wv,
      * fuse K/V weights + biases into a single (S_pad, 2*S_pad) bf16 block,
      * zero-pad S to a 128-aligned multiple of the K tile,
      * fold bq into wq_aug as a trailing row (one fewer tiny DMA)."""
    Hd = params["wq"].shape[0]
    S = params["wk"].shape[0]
    tk, S_pad = _choose_k_tile(S, max_tk=max_tk)
    pad = S_pad - S

    wkT = jnp.pad(params["wk"].T, ((0, pad), (0, pad)))
    wvT = jnp.pad(params["wv"].T, ((0, pad), (0, pad)))
    wkvT = jnp.concatenate([wkT, wvT], axis=1).astype(jnp.bfloat16)  # (S_pad, 2*S_pad)
    bkv = jnp.concatenate([jnp.pad(params["bk"], (0, pad)),
                           jnp.pad(params["bv"], (0, pad))])
    bkv = bkv.reshape(1, 2 * S_pad).astype(jnp.float32)
    wq_aug = jnp.concatenate(
        [params["wq"].T.astype(jnp.float32),
         params["bq"].reshape(1, Hd).astype(jnp.float32)], axis=0)   # (Hd+1, Hd)
    return {"wq_aug": wq_aug, "wkvT": wkvT, "bkv": bkv, "tk": tk, "S": S}


def cross_attention_pallas(channel_img, last_hidden_lstm, kparams,
                           batch_block=None):
    """channel_img: (B, C, H, W) f32; last_hidden_lstm: (B, Hd) f32, Hd == C."""
    B, C, H, W = channel_img.shape
    S = H * W
    Hd = last_hidden_lstm.shape[1]
    assert Hd == C, "bmm in scoringDot requires hidden_size == num_channels"

    # Validate the prepared weights against the runtime shapes (no silent padding bugs).
    tk = kparams["tk"]
    S_pad = kparams["wkvT"].shape[0]
    assert kparams["S"] == S, "kparams were prepared for a different spatial size"
    assert kparams["wkvT"].shape == (S_pad, 2 * S_pad)
    assert kparams["bkv"].shape == (1, 2 * S_pad)
    assert kparams["wq_aug"].shape == (Hd + 1, Hd)
    assert S_pad % tk == 0 and S_pad >= S

    bb = B if batch_block is None else batch_block
    assert B % bb == 0 and (bb == B or (bb * C) % 8 == 0), \
        "batch_block*C must be a multiple of 8 (or cover the whole batch)"
    nb = B // bb
    nk = S_pad // tk

    x2d = channel_img.reshape(B * C, S)      # f32; cast to bf16 inside the kernel
    if S_pad != S:
        x2d = jnp.pad(x2d, ((0, 0), (0, S_pad - S)))
    h = last_hidden_lstm.astype(jnp.float32)

    kernel = functools.partial(_cross_attention_kernel, S=S, C=C)

    # Resident-VMEM estimate (double-buffered inputs + accumulator).  Only set
    # an explicit limit when it exceeds the smallest scoped default (v5e 16 MiB).
    est = (2 * (bb * C) * tk * 4              # x tiles (f32, double-buffered)
           + 2 * tk * 2 * S_pad * 2           # wkvT tiles (bf16, double-buffered)
           + (bb * C) * 2 * S_pad * 4         # accumulator scratch (f32)
           + 2 * 2 * S_pad * 4                # bkv (f32)
           + (1 << 20))                       # small operands + headroom
    cp_kwargs = {"dimension_semantics": ("parallel", "arbitrary")}
    if est > 12 * 2**20:
        cp_kwargs["vmem_limit_bytes"] = min(int(est * 3 // 2), 64 * 2**20)

    return pl.pallas_call(
        kernel,
        out_shape=jax.ShapeDtypeStruct((B, C), jnp.float32),
        grid_spec=pltpu.PrefetchScalarGridSpec(
            num_scalar_prefetch=0,
            grid=(nb, nk),
            in_specs=[
                pl.BlockSpec((bb * C, tk), lambda b, k: (b, k)),       # x
                pl.BlockSpec((bb, Hd), lambda b, k: (b, 0)),           # h
                pl.BlockSpec((Hd + 1, Hd), lambda b, k: (0, 0)),       # wq_aug
                pl.BlockSpec((tk, 2 * S_pad), lambda b, k: (k, 0)),    # wkvT
                pl.BlockSpec((1, 2 * S_pad), lambda b, k: (0, 0)),     # bkv
            ],
            out_specs=pl.BlockSpec((bb, C), lambda b, k: (b, 0)),
            scratch_shapes=[pltpu.VMEM((bb * C, 2 * S_pad), jnp.float32)],
        ),
        compiler_params=pltpu.CompilerParams(**cp_kwargs),
    )(x2d, h, kparams["wq_aug"], kparams["wkvT"], kparams["bkv"])


def init_params(key, input_size, hidden_size):
    """Deterministic init mimicking nn.Linear default (U(-1/sqrt(fan_in), 1/sqrt(fan_in)))."""
    ks = jax.random.split(key, 6)

    def lin(kw, kb, out_f, in_f):
        bound = 1.0 / (in_f ** 0.5)
        w = jax.random.uniform(kw, (out_f, in_f), jnp.float32, -bound, bound)
        b = jax.random.uniform(kb, (out_f,), jnp.float32, -bound, bound)
        return w, b

    wq, bq = lin(ks[0], ks[1], hidden_size, hidden_size)
    wk, bk = lin(ks[2], ks[3], input_size, input_size)
    wv, bv = lin(ks[4], ks[5], input_size, input_size)
    return {"wq": wq, "bq": bq, "wk": wk, "bk": bk, "wv": wv, "bv": bv}


def cross_attention_reference(channel_img, hidden, p):
    """Pure-JAX (f32) replica of the PyTorch forward, for verification."""
    B, C, H, W = channel_img.shape
    x = channel_img.reshape(B, C, H * W)
    values = jnp.tanh(jnp.einsum("bcs,os->bco", x, p["wv"]) + p["bv"])       # (B, C, S)
    q = jnp.tanh(hidden @ p["wq"].T + p["bq"])                               # (B, Hd)
    keys = jnp.tanh(jnp.einsum("bcs,os->bco", x, p["wk"]) + p["bk"])         # (B, C, S)
    scores = jnp.einsum("bcs,bc->bs", keys, q) / 7.0                         # (B, S)
    w = jax.nn.softmax(scores, axis=1)                                       # (B, S)
    return jnp.einsum("bs,bcs->bc", w, values)                               # (B, C)


if __name__ == "__main__":
    key = jax.random.PRNGKey(0)

    def run_case(case_key, B, C, H, W, max_tk):
        S = H * W
        k_img, k_hid, k_param = jax.random.split(case_key, 3)
        channel_img = jax.random.normal(k_img, (B, C, H, W), jnp.float32)
        last_hidden = jax.random.normal(k_hid, (B, C), jnp.float32)
        params = init_params(k_param, input_size=S, hidden_size=C)
        kparams = prepare_kernel_params(params, max_tk=max_tk)  # one-time prep

        out = cross_attention_pallas(channel_img, last_hidden, kparams)
        out = jax.block_until_ready(out)

        ref = cross_attention_reference(channel_img, last_hidden, params)
        assert out.shape == (B, C)
        # bf16 MXU operands (f32 accumulation) -> loosened tolerance vs. f32 ref
        assert jnp.allclose(out, ref, atol=2e-2, rtol=2e-2), (out, ref)

    k1, k2 = jax.random.split(key)
    # Case 1: 128-aligned S=256 with tk=128 -> 2 K-steps (exercises the
    # accumulator grid, init/finalize pl.when, in-kernel bf16 cast).
    run_case(k1, B=2, C=4, H=16, W=16, max_tk=128)
    # Case 2: unaligned S=100 -> padded to 128 (exercises zero-padding of x /
    # weights and the -inf score-lane masking before the softmax).
    run_case(k2, B=2, C=4, H=10, W=10, max_tk=128)

    print("KERNEL_OK")
</pallas_src>

<mosaic_0001>
module attributes {stable_mosaic.version = 11 : i64} {
  func.func @_cross_attention_kernel(%arg0: i32, %arg1: i32, %arg2: memref<8x128xf32, #tpu.memory_space<vmem>>, %arg3: memref<2x4xf32, #tpu.memory_space<vmem>>, %arg4: memref<5x4xf32, #tpu.memory_space<vmem>>, %arg5: memref<128x512xbf16, #tpu.memory_space<vmem>>, %arg6: memref<1x512xf32, #tpu.memory_space<vmem>>, %arg7: memref<2x4xf32, #tpu.memory_space<vmem>>, %arg8: memref<8x512xf32, #tpu.memory_space<vmem>>) attributes {dimension_semantics = [#tpu.dimension_semantics<parallel>, #tpu.dimension_semantics<arbitrary>], iteration_bounds = array<i64: 1, 2>, scalar_prefetch = 0 : i64, scratch_operands = 1 : i64, tpu.core_type = #tpu.core_type<tc>, window_params = [{transform_indices = @transform_0, window_bounds = array<i64: 8, 128>}, {transform_indices = @transform_1, window_bounds = array<i64: 2, 4>}, {pipeline_mode = #tpu.pipeline_mode<synchronous>, transform_indices = @transform_2, window_bounds = array<i64: 5, 4>}, {transform_indices = @transform_3, window_bounds = array<i64: 128, 512>}, {pipeline_mode = #tpu.pipeline_mode<synchronous>, transform_indices = @transform_4, window_bounds = array<i64: 1, 512>}, {transform_indices = @transform_5, window_bounds = array<i64: 2, 4>}]} {
    %c0_i32 = arith.constant 0 : i32
    %0 = arith.cmpi eq, %arg1, %c0_i32 : i32
    %1 = arith.extui %0 : i1 to i32
    %c0_i32_0 = arith.constant 0 : i32
    %2 = arith.cmpi ne, %1, %c0_i32_0 : i32
    scf.if %2 {
      %cst_9 = arith.constant 0.000000e+00 : f32
      %13 = vector.broadcast %cst_9 : f32 to vector<8x512xf32>
      %c0_10 = arith.constant 0 : index
      %c0_11 = arith.constant 0 : index
      %14 = vector.load %arg8[%c0_10, %c0_11] : memref<8x512xf32, #tpu.memory_space<vmem>>, vector<8x512xf32>
      tpu.vector_store %arg8[%c0_10, %c0_11], %13 {strides = array<i32>} : memref<8x512xf32, #tpu.memory_space<vmem>>, vector<8x512xf32>,
    } else {
    }
    %c0 = arith.constant 0 : index
    %c0_1 = arith.constant 0 : index
    %3 = vector.load %arg2[%c0, %c0_1] : memref<8x128xf32, #tpu.memory_space<vmem>>, vector<8x128xf32>
    %4 = arith.truncf %3 : vector<8x128xf32> to vector<8x128xbf16>
    %c0_2 = arith.constant 0 : index
    %c0_3 = arith.constant 0 : index
    %5 = vector.load %arg8[%c0_2, %c0_3] : memref<8x512xf32, #tpu.memory_space<vmem>>, vector<8x512xf32>
    %c0_4 = arith.constant 0 : index
    %c0_5 = arith.constant 0 : index
    %6 = vector.load %arg5[%c0_4, %c0_5] : memref<128x512xbf16, #tpu.memory_space<vmem>>, vector<128x512xbf16>
    %cst = arith.constant dense<0.000000e+00> : vector<8x512xf32>
    %7 = tpu.matmul %4, %6, %cst {dimension_numbers = #tpu.dot_dimension_numbers<[1], [0], [0], [1], [0, 0, 1, 1], [], []>} : vector<8x128xbf16>, vector<128x512xbf16>, vector<8x512xf32> -> vector<8x512xf32>
    %8 = arith.addf %5, %7 : vector<8x512xf32>
    %c0_6 = arith.constant 0 : index
    %c0_7 = arith.constant 0 : index
    %9 = vector.load %arg8[%c0_6, %c0_7] : memref<8x512xf32, #tpu.memory_space<vmem>>, vector<8x512xf32>
    tpu.vector_store %arg8[%c0_6, %c0_7], %8 {strides = array<i32>} : memref<8x512xf32, #tpu.memory_space<vmem>>, vector<8x512xf32>,
    %c1_i32 = arith.constant 1 : i32
    %10 = arith.cmpi eq, %arg1, %c1_i32 : i32
    %11 = arith.extui %10 : i1 to i32
    %c0_i32_8 = arith.constant 0 : i32
    %12 = arith.cmpi ne, %11, %c0_i32_8 : i32
    scf.if %12 {
      %c0_9 = arith.constant 0 : index
      %c0_10 = arith.constant 0 : index
      %13 = vector.load %arg8[%c0_9, %c0_10] : memref<8x512xf32, #tpu.memory_space<vmem>>, vector<8x512xf32>
      %c0_11 = arith.constant 0 : index
      %c0_12 = arith.constant 0 : index
      %14 = vector.load %arg6[%c0_11, %c0_12] : memref<1x512xf32, #tpu.memory_space<vmem>>, vector<1x512xf32>
      %15 = vector.broadcast %14 : vector<1x512xf32> to vector<8x512xf32>
      %16 = arith.addf %13, %15 : vector<8x512xf32>
      %17 = math.tanh %16 : vector<8x512xf32>
      %18 = vector.extract_strided_slice %17 {offsets = [0, 0], sizes = [8, 256], strides = [1, 1]} : vector<8x512xf32> to vector<8x256xf32>
      %19 = vector.shape_cast %18 : vector<8x256xf32> to vector<2x4x256xf32>
      %20 = vector.extract_strided_slice %17 {offsets = [0, 256], sizes = [8, 256], strides = [1, 1]} : vector<8x512xf32> to vector<8x256xf32>
      %21 = vector.shape_cast %20 : vector<8x256xf32> to vector<2x4x256xf32>
      %c0_13 = arith.constant 0 : index
      %c0_14 = arith.constant 0 : index
      %22 = vector.load %arg4[%c0_13, %c0_14] : memref<5x4xf32, #tpu.memory_space<vmem>>, vector<5x4xf32>
      %c0_15 = arith.constant 0 : index
      %c0_16 = arith.constant 0 : index
      %23 = vector.load %arg3[%c0_15, %c0_16] : memref<2x4xf32, #tpu.memory_space<vmem>>, vector<2x4xf32>
      %24 = vector.shape_cast %23 : vector<2x4xf32> to vector<2x4x1xf32>
      %25 = vector.extract_strided_slice %22 {offsets = [0, 0], sizes = [4, 4], strides = [1, 1]} : vector<5x4xf32> to vector<4x4xf32>
      %26 = vector.shape_cast %25 : vector<4x4xf32> to vector<1x4x4xf32>
      %27 = vector.broadcast %24 : vector<2x4x1xf32> to vector<2x4x4xf32>
      %28 = vector.broadcast %26 : vector<1x4x4xf32> to vector<2x4x4xf32>
      %29 = arith.mulf %27, %28 : vector<2x4x4xf32>
      %cst_17 = arith.constant dense<0.000000e+00> : vector<2x4xf32>
      %30 = vector.multi_reduction <add>, %29, %cst_17 [1] : vector<2x4x4xf32> to vector<2x4xf32>
      %31 = vector.extract_strided_slice %22 {offsets = [4, 0], sizes = [1, 4], strides = [1, 1]} : vector<5x4xf32> to vector<1x4xf32>
      %32 = vector.broadcast %31 : vector<1x4xf32> to vector<2x4xf32>
      %33 = arith.addf %30, %32 : vector<2x4xf32>
      %34 = math.tanh %33 : vector<2x4xf32>
      %cst_18 = arith.constant 0.142857149 : f32
      %35 = vector.broadcast %cst_18 : f32 to vector<2x4xf32>
      %36 = arith.mulf %34, %35 : vector<2x4xf32>
      %37 = vector.shape_cast %36 : vector<2x4xf32> to vector<2x4x1xf32>
      %38 = vector.broadcast %37 : vector<2x4x1xf32> to vector<2x4x256xf32>
      %39 = arith.mulf %38, %19 : vector<2x4x256xf32>
      %cst_19 = arith.constant dense<0.000000e+00> : vector<2x256xf32>
      %40 = vector.multi_reduction <add>, %39, %cst_19 [1] : vector<2x4x256xf32> to vector<2x256xf32>
      %41 = tpu.iota {dimensions = array<i32: 1>} : vector<2x256xi32>
      %c256_i32 = arith.constant 256 : i32
      %42 = vector.broadcast %c256_i32 : i32 to vector<2x256xi32>
      %43 = arith.cmpi slt, %41, %42 : vector<2x256xi32>
      %cst_20 = arith.constant -1.000000e+30 : f32
      %44 = vector.broadcast %cst_20 : f32 to vector<2x256xf32>
      %45 = arith.select %43, %40, %44 : vector<2x256xi1>, vector<2x256xf32>
      %cst_21 = arith.constant dense<0xFF800000> : vector<2xf32>
      %46 = vector.multi_reduction <maximumf>, %45, %cst_21 [1] : vector<2x256xf32> to vector<2xf32>
      %47 = vector.shape_cast %46 : vector<2xf32> to vector<2x1xf32>
      %48 = vector.broadcast %47 : vector<2x1xf32> to vector<2x256xf32>
      %49 = arith.subf %45, %48 : vector<2x256xf32>
      %50 = math.exp %49 : vector<2x256xf32>
      %cst_22 = arith.constant dense<0.000000e+00> : vector<2xf32>
      %51 = vector.multi_reduction <add>, %50, %cst_22 [1] : vector<2x256xf32> to vector<2xf32>
      %52 = vector.shape_cast %51 : vector<2xf32> to vector<2x1xf32>
      %53 = vector.shape_cast %50 : vector<2x256xf32> to vector<2x1x256xf32>
      %54 = vector.broadcast %53 : vector<2x1x256xf32> to vector<2x4x256xf32>
      %55 = arith.mulf %21, %54 : vector<2x4x256xf32>
      %cst_23 = arith.constant dense<0.000000e+00> : vector<2x4xf32>
      %56 = vector.multi_reduction <add>, %55, %cst_23 [2] : vector<2x4x256xf32> to vector<2x4xf32>
      %57 = tpu.reciprocal %52 {approx = true} : vector<2x1xf32> -> vector<2x1xf32>
      %58 = vector.broadcast %57 : vector<2x1xf32> to vector<2x4xf32>
      %59 = arith.mulf %56, %58 : vector<2x4xf32>
      %c0_24 = arith.constant 0 : index
      %c0_25 = arith.constant 0 : index
      %60 = vector.load %arg7[%c0_24, %c0_25] : memref<2x4xf32, #tpu.memory_space<vmem>>, vector<2x4xf32>
      tpu.vector_store %arg7[%c0_24, %c0_25], %59 {strides = array<i32>} : memref<2x4xf32, #tpu.memory_space<vmem>>, vector<2x4xf32>,
    } else {
    }
    return
  }
  func.func @transform_0(%arg0: i32, %arg1: i32) -> (i32, i32) {
    %c0_i32 = arith.constant 0 : i32
    return %arg0, %arg1 : i32, i32
  }
  func.func @transform_1(%arg0: i32, %arg1: i32) -> (i32, i32) {
    %c0_i32 = arith.constant 0 : i32
    %c0_i32_0 = arith.constant 0 : i32
    return %arg0, %c0_i32 : i32, i32
  }
  func.func @transform_2(%arg0: i32, %arg1: i32) -> (i32, i32) {
    %c0_i32 = arith.constant 0 : i32
    %c0_i32_0 = arith.constant 0 : i32
    %c0_i32_1 = arith.constant 0 : i32
    return %c0_i32, %c0_i32_0 : i32, i32
  }
  func.func @transform_3(%arg0: i32, %arg1: i32) -> (i32, i32) {
    %c0_i32 = arith.constant 0 : i32
    %c0_i32_0 = arith.constant 0 : i32
    return %arg1, %c0_i32 : i32, i32
  }
  func.func @transform_4(%arg0: i32, %arg1: i32) -> (i32, i32) {
    %c0_i32 = arith.constant 0 : i32
    %c0_i32_0 = arith.constant 0 : i32
    %c0_i32_1 = arith.constant 0 : i32
    return %c0_i32, %c0_i32_0 : i32, i32
  }
  func.func @transform_5(%arg0: i32, %arg1: i32) -> (i32, i32) {
    %c0_i32 = arith.constant 0 : i32
    %c0_i32_0 = arith.constant 0 : i32
    return %arg0, %c0_i32 : i32, i32
  }
}

</mosaic_0001>

<llo_original>
// kernel: tpu_custom_call.1
$region0: #{tpu_custom_call.1}
  #allocation0 [shape = 'u32[]', space=smem, size = 0x4, offset = 0x4, fixed_abs, tag = 'smem constant byte address 0x4 - core index']
  #allocation1 [shape = 'u32[144,128]{1,0:T(1,128)}', space=vmem, size = 0x12000, scoped, tag = 'internal scratch']
  #allocation2 [shape = 'f32[8,512]{1,0:T(8,128)}', space=vmem, size = 0x4000, scoped, tag = 'scratch operand']
  %s0 = inlined_call_operand.hbm [shape: f32[8,256], index: 0, kind: input, shape index: {}]
  %s1 = inlined_call_operand.vmem [shape: f32[2,4], index: 1, kind: input, shape index: {}]
  %s2 = inlined_call_operand.vmem [shape: f32[5,4], index: 2, kind: input, shape index: {}]
  %s3 = inlined_call_operand.hbm [shape: bf16[256,512], index: 3, kind: input, shape index: {}]
  %s4 = inlined_call_operand.vmem [shape: f32[1,512], index: 4, kind: input, shape index: {}]
  %s5 = inlined_call_operand.hbm [shape: f32[2,4], index: 5, kind: output, shape index: {}]
  %s6 = sld [smem:[#allocation0]]
  $region69: #{tpu_custom_call.1} parent=0
    _
  %s8 = ssub.s32 1, %s6
  %s9 = scalar_select 0, %s8, %s6
  $region1: #{tpu_custom_call.1} parent=0
    #allocation3 [shape = 'u8[8192]{0}', space=vmem, size = 0x2000, scoped, tag = 'input window, operand 0']
    #allocation4 [shape = 's32[2]{0}', space=sflag, size = 0x8, scoped, tag = 'scoped memory for tpu_custom_call.1']
    #allocation5 [shape = 's32[2]{0}', space=sflag, size = 0x8, scoped, tag = 'scoped memory for tpu_custom_call.1']
    #allocation6 [shape = 'u8[262144]{0}', space=vmem, size = 0x40000, scoped, tag = 'input window, operand 3']
    #allocation7 [shape = 's32[2]{0}', space=sflag, size = 0x8, scoped, tag = 'scoped memory for tpu_custom_call.1']
    #allocation8 [shape = 'u8[1024]{0}', space=vmem, size = 0x400, scoped, tag = 'output window, operand 0, single buffered']
    %10 = vsyncpa [#allocation4], 0
    %s11 = scalar_lea.sflag [#allocation4], 1
    %12 = vsyncpa %s11, 0
    %13 = vsyncpa [#allocation7], 0
    %s14 = scalar_lea.sflag [#allocation7], 1
    %15 = vsyncpa %s14, 0
    %16 = vsyncpa [#allocation5], 0
    loop: start=0, step=1, limit=4
    $region2: #{tpu_custom_call.1} parent=1 // loop_pre_header
      _
    $region3: #{tpu_custom_call.1} parent=1 // loop_header
      %s18 = sphi 0, %s22
      %p19 = scmp.ge.s32.totalorder %s18, 4
      %s25 = sphi 0, %s37
      %s26 = sphi 0, %s33
      %s27 = sphi 0, %s25
      %s28 = sphi 0, %s26
      %s29 = sphi 0, %s27
      %s30 = sphi 0, %s28
      %s42 = sphi 0, %s44
      %s45 = sphi 0, %s42
      %s46 = sphi 0, %s45
      %s62 = sphi 0, %s46
      %s68 = sphi 0, %s70
      %s71 = sphi 0, %s68
      %s72 = sphi 0, %s71
      %s88 = sphi 0, %s72
      %s92 = sphi 0, %s92
      %s94 = sphi 0, %s92
      %s95 = sphi 0, %s94
      %s109 = sphi 0, %s95
      %s115 = sphi 0, %s117
      %s118 = sphi 0, %s115
      %s119 = sphi 0, %s118
      %s135 = sphi 0, %s119
      %s139 = sphi 0, %s139
      %s141 = sphi 0, %s139
      %s142 = sphi 0, %s141
      %s156 = sphi 0, %s142
      %s162 = sphi 0, %s164
      %s165 = sphi 0, %s162
      %s166 = sphi 0, %s165
      %s182 = sphi 0, %s166
    $region4: #{tpu_custom_call.1} parent=1 // loop_header_branch
      %21 = sbr.rel (%p19) target = $region8
    $region5: #{tpu_custom_call.1} parent=1 // loop_body
      %s23 = ssub.s32 %s18, 1
      %s24 = ssub.s32 %s18, 2
      %s31 = sadd.s32 1, %s26
      %p32 = scmp.ge.s32.totalorder %s31, 2
      %s33 = scalar_select %p32, 0, %s31
      %s34 = sadd.s32 1, %s25
      %s35 = scalar_select %p32, %s34, %s25
      %p36 = scmp.ge.s32.totalorder %s35, 1
      %s37 = scalar_select %p36, 0, %s35
      %s38 = ssub.s32 %s25, %s37
      %s39 = ssub.s32 %s26, %s33
      %s40 = sor.u32 %s38, %s39
      %p41 = scmp.eq.s32.totalorder %s40, 0
      %s43 = sadd.s32 %s42, 1
      %s44 = scalar_select %p41, %s42, %s43
      %p47 = pneg %p41
      %p48 = scmp.eq.s32.totalorder %s18, 1
      %p49 = por %p47, %p48
      %p50 = scmp.ne.s32.totalorder %s42, %s45
      %p51 = scmp.eq.s32.totalorder %s18, 0
      %p52 = por %p50, %p51
      %p53 = scmp.ne.s32.totalorder %s42, %s45
      %p54 = scmp.eq.s32.totalorder %s23, 1
      %p55 = por %p53, %p54
      %p56 = scmp.ne.s32.totalorder %s45, %s46
      %p57 = scmp.eq.s32.totalorder %s23, 0
      %p58 = por %p56, %p57
      %p59 = scmp.ne.s32.totalorder %s45, %s46
      %p60 = scmp.eq.s32.totalorder %s24, 1
      %p61 = por %p59, %p60
      %p63 = scmp.ne.s32.totalorder %s46, %s62
      %p64 = scmp.eq.s32.totalorder %s24, 0
      %p65 = por %p63, %p64
      %s66 = ssub.s32 %s25, %s37
      %p67 = scmp.eq.s32.totalorder %s66, 0
      %s69 = sadd.s32 %s68, 1
      %s70 = scalar_select %p67, %s68, %s69
      %p73 = pneg %p67
      %p74 = scmp.eq.s32.totalorder %s18, 1
      %p75 = por %p73, %p74
      %p76 = scmp.ne.s32.totalorder %s68, %s71
      %p77 = scmp.eq.s32.totalorder %s18, 0
      %p78 = por %p76, %p77
      %p79 = scmp.ne.s32.totalorder %s68, %s71
      %p80 = scmp.eq.s32.totalorder %s23, 1
      %p81 = por %p79, %p80
      %p82 = scmp.ne.s32.totalorder %s71, %s72
      %p83 = scmp.eq.s32.totalorder %s23, 0
      %p84 = por %p82, %p83
      %p85 = scmp.ne.s32.totalorder %s71, %s72
      %p86 = scmp.eq.s32.totalorder %s24, 1
      %p87 = por %p85, %p86
      %p89 = scmp.ne.s32.totalorder %s72, %s88
      %p90 = scmp.eq.s32.totalorder %s24, 0
      %p91 = por %p89, %p90
      %s93 = sadd.s32 %s92, 1
      %p96 = scmp.eq.s32.totalorder %s18, 1
      %p97 = scmp.ne.s32.totalorder %s92, %s94
      %p98 = scmp.eq.s32.totalorder %s18, 0
      %p99 = por %p97, %p98
      %p100 = scmp.ne.s32.totalorder %s92, %s94
      %p101 = scmp.eq.s32.totalorder %s23, 1
      %p102 = por %p100, %p101
      %p103 = scmp.ne.s32.totalorder %s94, %s95
      %p104 = scmp.eq.s32.totalorder %s23, 0
      %p105 = por %p103, %p104
      %p106 = scmp.ne.s32.totalorder %s94, %s95
      %p107 = scmp.eq.s32.totalorder %s24, 1
      %p108 = por %p106, %p107
      %p110 = scmp.ne.s32.totalorder %s95, %s109
      %p111 = scmp.eq.s32.totalorder %s24, 0
      %p112 = por %p110, %p111
      %s113 = ssub.s32 %s26, %s33
      %p114 = scmp.eq.s32.totalorder %s113, 0
      %s116 = sadd.s32 %s115, 1
      %s117 = scalar_select %p114, %s115, %s116
      %p120 = pneg %p114
      %p121 = scmp.eq.s32.totalorder %s18, 1
      %p122 = por %p120, %p121
      %p123 = scmp.ne.s32.totalorder %s115, %s118
      %p124 = scmp.eq.s32.totalorder %s18, 0
      %p125 = por %p123, %p124
      %p126 = scmp.ne.s32.totalorder %s115, %s118
      %p127 = scmp.eq.s32.totalorder %s23, 1
      %p128 = por %p126, %p127
      %p129 = scmp.ne.s32.totalorder %s118, %s119
      %p130 = scmp.eq.s32.totalorder %s23, 0
      %p131 = por %p129, %p130
      %p132 = scmp.ne.s32.totalorder %s118, %s119
      %p133 = scmp.eq.s32.totalorder %s24, 1
      %p134 = por %p132, %p133
      %p136 = scmp.ne.s32.totalorder %s119, %s135
      %p137 = scmp.eq.s32.totalorder %s24, 0
      %p138 = por %p136, %p137
      %s140 = sadd.s32 %s139, 1
      %p143 = scmp.eq.s32.totalorder %s18, 1
      %p144 = scmp.ne.s32.totalorder %s139, %s141
      %p145 = scmp.eq.s32.totalorder %s18, 0
      %p146 = por %p144, %p145
      %p147 = scmp.ne.s32.totalorder %s139, %s141
      %p148 = scmp.eq.s32.totalorder %s23, 1
      %p149 = por %p147, %p148
      %p150 = scmp.ne.s32.totalorder %s141, %s142
      %p151 = scmp.eq.s32.totalorder %s23, 0
      %p152 = por %p150, %p151
      %p153 = scmp.ne.s32.totalorder %s141, %s142
      %p154 = scmp.eq.s32.totalorder %s24, 1
      %p155 = por %p153, %p154
      %p157 = scmp.ne.s32.totalorder %s142, %s156
      %p158 = scmp.eq.s32.totalorder %s24, 0
      %p159 = por %p157, %p158
      %s160 = ssub.s32 %s25, %s37
      %p161 = scmp.eq.s32.totalorder %s160, 0
      %s163 = sadd.s32 %s162, 1
      %s164 = scalar_select %p161, %s162, %s163
      %p167 = pneg %p161
      %p168 = scmp.eq.s32.totalorder %s18, 1
      %p169 = por %p167, %p168
      %p170 = scmp.ne.s32.totalorder %s162, %s165
      %p171 = scmp.eq.s32.totalorder %s18, 0
      %p172 = por %p170, %p171
      %p173 = scmp.ne.s32.totalorder %s162, %s165
      %p174 = scmp.eq.s32.totalorder %s23, 1
      %p175 = por %p173, %p174
      %p176 = scmp.ne.s32.totalorder %s165, %s166
      %p177 = scmp.eq.s32.totalorder %s23, 0
      %p178 = por %p176, %p177
      %p179 = scmp.ne.s32.totalorder %s165, %s166
      %p180 = scmp.eq.s32.totalorder %s24, 1
      %p181 = por %p179, %p180
      %p183 = scmp.ne.s32.totalorder %s166, %s182
      %p184 = scmp.eq.s32.totalorder %s24, 0
      %p185 = por %p183, %p184
      %p186 = scmp.le.s32.totalorder 1, %s18
      %p187 = scmp.lt.s32.totalorder %s18, 3
      %p188 = pnand %p186, %p187
      %p189 = pneg %p188
      // Predicated region
      $region9: #{tpu_custom_call.1} parent=5 // pred_check
        _
      $region10: #{tpu_custom_call.1} parent=5 // pred_check_branch
        %191 = sbr.rel (%p188) target = $region12
      $region11: #{tpu_custom_call.1} parent=5 // pred_region
        %s192 = ssub.s32 %s18, 1
        // Predicated region
        $region13: #{tpu_custom_call.1} parent=11 // pred_check
          %p193 = pneg %p84
        $region14: #{tpu_custom_call.1} parent=11 // pred_check_branch
          %195 = sbr.rel (%p193) target = $region16
        $region15: #{tpu_custom_call.1} parent=11 // pred_region
          %p196 = scmp.lt.s32.totalorder %s27, 0
          %s197 = scalar_select %p196, %s27, 0
          %s198 = smul.addr %s197, 2
          %s199 = scalar_lea.vmem %s1, %s198
        $region16: #{tpu_custom_call.1} parent=11 // pred_fallthru
          _
        // Predicated region
        $region17: #{tpu_custom_call.1} parent=11 // pred_check
          %p200 = pneg %p105
        $region18: #{tpu_custom_call.1} parent=11 // pred_check_branch
          %202 = sbr.rel (%p200) target = $region20
        $region19: #{tpu_custom_call.1} parent=11 // pred_region
          _
        $region20: #{tpu_custom_call.1} parent=11 // pred_fallthru
          _
        // Predicated region
        $region21: #{tpu_custom_call.1} parent=11 // pred_check
          %p203 = pneg %p152
        $region22: #{tpu_custom_call.1} parent=11 // pred_check_branch
          %205 = sbr.rel (%p203) target = $region24
        $region23: #{tpu_custom_call.1} parent=11 // pred_region
          _
        $region24: #{tpu_custom_call.1} parent=11 // pred_fallthru
          _
      $region12: #{tpu_custom_call.1} parent=5 // pred_fallthru
        _
      %p206 = scmp.lt.s32.totalorder %s18, 2
      // Predicated region
      $region25: #{tpu_custom_call.1} parent=5 // pred_check
        %p207 = pneg %p206
      $region26: #{tpu_custom_call.1} parent=5 // pred_check_branch
        %209 = sbr.rel (%p207) target = $region28
      $region27: #{tpu_custom_call.1} parent=5 // pred_region
        // Predicated region
        $region29: #{tpu_custom_call.1} parent=27 // pred_check
          %p210 = pneg %p52
        $region30: #{tpu_custom_call.1} parent=27 // pred_check_branch
          %212 = sbr.rel (%p210) target = $region32
        $region31: #{tpu_custom_call.1} parent=27 // pred_region
          %s213 = sand.u32 %s42, 1
          %s214 = scalar_lea.sflag [#allocation4], %s213
          %s215 = sand.u32 %s42, 1
          %s216 = smul.addr %s215, 8
          %s217 = scalar_lea.vmem [#allocation3], %s216
          %s219 = ssub.s32 128, 128
          %220 = vsyncadd %s214, %s219
          %s221 = smul.addr %s25, 2
          %s222 = sadd.s32 %s26, %s221
          %s223 = smul.addr %s222, 128
          %s224 = scalar_lea.hbm %s0, %s223
          %s226 = sshll.u32 %s217, 4
          %s227 = int_to_ptr.vmem [resolvable:$true] %s226
          %229 = dma.hbm_to_vmem [thread:$0]  %s224, 128, %s227, %s214
        $region32: #{tpu_custom_call.1} parent=27 // pred_fallthru
          _
        // Predicated region
        $region33: #{tpu_custom_call.1} parent=27 // pred_check
          %p230 = pneg %p125
        $region34: #{tpu_custom_call.1} parent=27 // pred_check_branch
          %232 = sbr.rel (%p230) target = $region36
        $region35: #{tpu_custom_call.1} parent=27 // pred_region
          %s233 = sand.u32 %s115, 1
          %s234 = scalar_lea.sflag [#allocation7], %s233
          %s235 = sand.u32 %s115, 1
          %s236 = smul.addr %s235, 256
          %s237 = scalar_lea.vmem [#allocation6], %s236
          %s238 = smul.u32 16, %s26
          %s240 = ssub.s32 4096, 4096
          %241 = vsyncadd %s234, %s240
          %s242 = smul.addr %s238, 4
          %s243 = smul.addr %s242, 64
          %s244 = scalar_lea.hbm %s3, %s243
          %s245 = sshll.u32 %s237, 4
          %s246 = int_to_ptr.vmem [resolvable:$true] %s245
          %251 = dma.hbm_to_vmem [thread:$0]  %s244, 4096, %s246, %s234, 256, 256, 16
        $region36: #{tpu_custom_call.1} parent=27 // pred_fallthru
          _
      $region28: #{tpu_custom_call.1} parent=5 // pred_fallthru
        _
      %p252 = scmp.le.s32.totalorder 1, %s18
      %p253 = scmp.lt.s32.totalorder %s18, 3
      %p254 = pnand %p252, %p253
      %p255 = pneg %p254
      // Predicated region
      $region37: #{tpu_custom_call.1} parent=5 // pred_check
        _
      $region38: #{tpu_custom_call.1} parent=5 // pred_check_branch
        %257 = sbr.rel (%p254) target = $region40
      $region39: #{tpu_custom_call.1} parent=5 // pred_region
        %s258 = ssub.s32 %s18, 1
        %s259 = sand.u32 %s45, 1
        %s260 = scalar_lea.sflag [#allocation4], %s259
        %s261 = sand.u32 %s45, 1
        %s262 = smul.addr %s261, 8
        %s263 = scalar_lea.vmem [#allocation3], %s262
        // Predicated region
        $region41: #{tpu_custom_call.1} parent=39 // pred_check
          %p264 = pneg %p58
        $region42: #{tpu_custom_call.1} parent=39 // pred_check_branch
          %266 = sbr.rel (%p264) target = $region44
        $region43: #{tpu_custom_call.1} parent=39 // pred_region
          %267 = dma.done %s260, 128
        $region44: #{tpu_custom_call.1} parent=39 // pred_fallthru
          _
        %s268 = sand.u32 %s118, 1
        %s269 = scalar_lea.sflag [#allocation7], %s268
        %s270 = sand.u32 %s118, 1
        %s271 = smul.addr %s270, 256
        %s272 = scalar_lea.vmem [#allocation6], %s271
        // Predicated region
        $region45: #{tpu_custom_call.1} parent=39 // pred_check
          %p273 = pneg %p131
        $region46: #{tpu_custom_call.1} parent=39 // pred_check_branch
          %275 = sbr.rel (%p273) target = $region48
        $region47: #{tpu_custom_call.1} parent=39 // pred_region
          %276 = dma.done %s269, 4096
        $region48: #{tpu_custom_call.1} parent=39 // pred_fallthru
          _
        %s277 = sand.u32 %s45, 1
        %s278 = scalar_lea.sflag [#allocation4], %s277
        %s279 = sand.u32 %s45, 1
        %s280 = smul.addr %s279, 8
        %s281 = scalar_lea.vmem [#allocation3], %s280
        %p282 = pneg %p58
        %p283 = pneg %p55
        %p284 = scmp.lt.s32.totalorder %s27, 0
        %s285 = scalar_select %p284, %s27, 0
        %s286 = smul.addr %s285, 2
        %s287 = scalar_lea.vmem %s1, %s286
        %p288 = pneg %p84
        %p289 = pneg %p81
        %p290 = pneg %p105
        %p291 = pneg %p102
        %s292 = sand.u32 %s118, 1
        %s293 = scalar_lea.sflag [#allocation7], %s292
        %s294 = sand.u32 %s118, 1
        %s295 = smul.addr %s294, 256
        %s296 = scalar_lea.vmem [#allocation6], %s295
        %p297 = pneg %p131
        %p298 = pneg %p128
        %p299 = pneg %p152
        %p300 = pneg %p149
        %p301 = pneg %p178
        %p302 = pneg %p175
        %p303 = scmp.lt.s32.totalorder %s27, 0
        %s304 = scalar_select %p303, %s27, 0
        %s305 = smul.addr %s304, 2
        %s306 = scalar_lea.vmem %s1, %s305
        %s307 = smul.u32 16, %s28
        %p309 = scmp.eq.s32.totalorder %s28, 0
        // Predicated region
        $region49: #{tpu_custom_call.1} parent=39 // pred_check
          %p310 = pneg %p309
        $region50: #{tpu_custom_call.1} parent=39 // pred_check_branch
          %312 = sbr.rel (%p310) target = $region52
        $region51: #{tpu_custom_call.1} parent=39 // pred_region
          %313 = vst [vmem:[#allocation2] sm:$0xff] 0.0
          %314 = vst [vmem:[#allocation2 + $0x8] sm:$0xff] 0.0
          %315 = vst [vmem:[#allocation2 + $0x10] sm:$0xff] 0.0
          %316 = vst [vmem:[#allocation2 + $0x18] sm:$0xff] 0.0
        $region52: #{tpu_custom_call.1} parent=39 // pred_fallthru
          _
        %v317 = vld [vmem:[%s263] sm:$0xff]
        %v318 = vpack.c.bf16 %v317, %v317
        %v319 = vld [vmem:[#allocation2] sm:$0xff]
        %v320 = vld [vmem:[#allocation2 + $0x8] sm:$0xff]
        %v321 = vld [vmem:[#allocation2 + $0x10] sm:$0xff]
        %v322 = vld [vmem:[#allocation2 + $0x18] sm:$0xff]
        %v323 = vld [vmem:[%s272] sm:$0xff]
        %v324 = vld [vmem:[%s272 + $0x8] sm:$0xff]
        %v325 = vld [vmem:[%s272 + $0x10] sm:$0xff]
        %v326 = vld [vmem:[%s272 + $0x18] sm:$0xff]
        %v327 = vld [vmem:[%s272 + $0x20] sm:$0xff]
        %v328 = vld [vmem:[%s272 + $0x28] sm:$0xff]
        %v329 = vld [vmem:[%s272 + $0x30] sm:$0xff]
        %v330 = vld [vmem:[%s272 + $0x38] sm:$0xff]
        %v331 = vld [vmem:[%s272 + $0x40] sm:$0xff]
        %v332 = vld [vmem:[%s272 + $0x48] sm:$0xff]
        %v333 = vld [vmem:[%s272 + $0x50] sm:$0xff]
        %v334 = vld [vmem:[%s272 + $0x58] sm:$0xff]
        %v335 = vld [vmem:[%s272 + $0x60] sm:$0xff]
        %v336 = vld [vmem:[%s272 + $0x68] sm:$0xff]
        %v337 = vld [vmem:[%s272 + $0x70] sm:$0xff]
        %v338 = vld [vmem:[%s272 + $0x78] sm:$0xff]
        %v339 = vld [vmem:[%s272 + $0x80] sm:$0xff]
        %v340 = vld [vmem:[%s272 + $0x88] sm:$0xff]
        %v341 = vld [vmem:[%s272 + $0x90] sm:$0xff]
        %v342 = vld [vmem:[%s272 + $0x98] sm:$0xff]
        %v343 = vld [vmem:[%s272 + $0xa0] sm:$0xff]
        %v344 = vld [vmem:[%s272 + $0xa8] sm:$0xff]
        %v345 = vld [vmem:[%s272 + $0xb0] sm:$0xff]
        %v346 = vld [vmem:[%s272 + $0xb8] sm:$0xff]
        %v347 = vld [vmem:[%s272 + $0xc0] sm:$0xff]
        %v348 = vld [vmem:[%s272 + $0xc8] sm:$0xff]
        %v349 = vld [vmem:[%s272 + $0xd0] sm:$0xff]
        %v350 = vld [vmem:[%s272 + $0xd8] sm:$0xff]
        %v351 = vld [vmem:[%s272 + $0xe0] sm:$0xff]
        %v352 = vld [vmem:[%s272 + $0xe8] sm:$0xff]
        %v353 = vld [vmem:[%s272 + $0xf0] sm:$0xff]
        %v354 = vld [vmem:[%s272 + $0xf8] sm:$0xff]
        %v387 = vunpack.c.l.b16 %v323
        %v388 = vunpack.c.h.b16 %v323
        %v389 = vunpack.c.l.b16 %v324
        %v390 = vunpack.c.h.b16 %v324
        %v391 = vunpack.c.l.b16 %v325
        %v392 = vunpack.c.h.b16 %v325
        %v393 = vunpack.c.l.b16 %v326
        %v394 = vunpack.c.h.b16 %v326
        %v395 = vunpack.c.l.b16 %v327
        %v396 = vunpack.c.h.b16 %v327
        %v397 = vunpack.c.l.b16 %v328
        %v398 = vunpack.c.h.b16 %v328
        %v399 = vunpack.c.l.b16 %v329
        %v400 = vunpack.c.h.b16 %v329
        %v401 = vunpack.c.l.b16 %v330
        %v402 = vunpack.c.h.b16 %v330
        %v403 = vunpack.c.l.b16 %v331
        %v404 = vunpack.c.h.b16 %v331
        %v405 = vunpack.c.l.b16 %v332
        %v406 = vunpack.c.h.b16 %v332
        %v407 = vunpack.c.l.b16 %v333
        %v408 = vunpack.c.h.b16 %v333
        %v409 = vunpack.c.l.b16 %v334
        %v410 = vunpack.c.h.b16 %v334
        %v411 = vunpack.c.l.b16 %v335
        %v412 = vunpack.c.h.b16 %v335
        %v413 = vunpack.c.l.b16 %v336
        %v414 = vunpack.c.h.b16 %v336
        %v415 = vunpack.c.l.b16 %v337
        %v416 = vunpack.c.h.b16 %v337
        %v417 = vunpack.c.l.b16 %v338
        %v418 = vunpack.c.h.b16 %v338
        %v419 = vunpack.c.l.b16 %v339
        %v420 = vunpack.c.h.b16 %v339
        %v421 = vunpack.c.l.b16 %v340
        %v422 = vunpack.c.h.b16 %v340
        %v423 = vunpack.c.l.b16 %v341
        %v424 = vunpack.c.h.b16 %v341
        %v425 = vunpack.c.l.b16 %v342
        %v426 = vunpack.c.h.b16 %v342
        %v427 = vunpack.c.l.b16 %v343
        %v428 = vunpack.c.h.b16 %v343
        %v429 = vunpack.c.l.b16 %v344
        %v430 = vunpack.c.h.b16 %v344
        %v431 = vunpack.c.l.b16 %v345
        %v432 = vunpack.c.h.b16 %v345
        %v433 = vunpack.c.l.b16 %v346
        %v434 = vunpack.c.h.b16 %v346
        %v435 = vunpack.c.l.b16 %v347
        %v436 = vunpack.c.h.b16 %v347
        %v437 = vunpack.c.l.b16 %v348
        %v438 = vunpack.c.h.b16 %v348
        %v439 = vunpack.c.l.b16 %v349
        %v440 = vunpack.c.h.b16 %v349
        %v441 = vunpack.c.l.b16 %v350
        %v442 = vunpack.c.h.b16 %v350
        %v443 = vunpack.c.l.b16 %v351
        %v444 = vunpack.c.h.b16 %v351
        %v445 = vunpack.c.l.b16 %v352
        %v446 = vunpack.c.h.b16 %v352
        %v447 = vunpack.c.l.b16 %v353
        %v448 = vunpack.c.h.b16 %v353
        %v449 = vunpack.c.l.b16 %v354
        %v450 = vunpack.c.h.b16 %v354
        %v451 = vpack.c.b16 %v391, %v387
        %v452 = vpack.c.b16 %v392, %v388
        %v453 = vpack.c.b16 %v393, %v389
        %v454 = vpack.c.b16 %v394, %v390
        %v455 = vpack.c.b16 %v399, %v395
        %v456 = vpack.c.b16 %v400, %v396
        %v457 = vpack.c.b16 %v401, %v397
        %v458 = vpack.c.b16 %v402, %v398
        %v459 = vpack.c.b16 %v407, %v403
        %v460 = vpack.c.b16 %v408, %v404
        %v461 = vpack.c.b16 %v409, %v405
        %v462 = vpack.c.b16 %v410, %v406
        %v463 = vpack.c.b16 %v415, %v411
        %v464 = vpack.c.b16 %v416, %v412
        %v465 = vpack.c.b16 %v417, %v413
        %v466 = vpack.c.b16 %v418, %v414
        %v467 = vpack.c.b16 %v423, %v419
        %v468 = vpack.c.b16 %v424, %v420
        %v469 = vpack.c.b16 %v425, %v421
        %v470 = vpack.c.b16 %v426, %v422
        %v471 = vpack.c.b16 %v431, %v427
        %v472 = vpack.c.b16 %v432, %v428
        %v473 = vpack.c.b16 %v433, %v429
        %v474 = vpack.c.b16 %v434, %v430
        %v475 = vpack.c.b16 %v439, %v435
        %v476 = vpack.c.b16 %v440, %v436
        %v477 = vpack.c.b16 %v441, %v437
        %v478 = vpack.c.b16 %v442, %v438
        %v479 = vpack.c.b16 %v447, %v443
        %v480 = vpack.c.b16 %v448, %v444
        %v481 = vpack.c.b16 %v449, %v445
        %v482 = vpack.c.b16 %v450, %v446
        %515 = vmatprep.subr.bf16.mxu0 %v480
        %516 = vmatpush1.bf16.msra.mxu0 %v479
        %517 = vmatprep.subr.bf16.mxu0 %v476
        %518 = vmatpush1.bf16.msra.mxu0 %v475
        %519 = vmatprep.subr.bf16.mxu0 %v472
        %520 = vmatpush1.bf16.msra.mxu0 %v471
        %521 = vmatprep.subr.bf16.mxu0 %v468
        %522 = vmatpush1.bf16.msra.mxu0 %v467
        %523 = vmatprep.subr.bf16.mxu0 %v464
        %524 = vmatpush1.bf16.msra.mxu0 %v463
        %525 = vmatprep.subr.bf16.mxu0 %v460
        %526 = vmatpush1.bf16.msra.mxu0 %v459
        %527 = vmatprep.subr.bf16.mxu0 %v456
        %528 = vmatpush1.bf16.msra.mxu0 %v455
        %529 = vmatprep.subr.bf16.mxu0 %v452
        %530 = vmatpush1.bf16.msra.mxu0 %v451
        %531 = vmatprep.subr.bf16.mxu0 0
        %532 = vmatpush2.bf16.msra.mxu0 0
        %533 = vmatprep.subr.bf16.mxu0 0
        %534 = vmatpush2.bf16.msra.mxu0 0
        %535 = vmatprep.subr.bf16.mxu0 0
        %536 = vmatpush2.bf16.msra.mxu0 0
        %537 = vmatprep.subr.bf16.mxu0 0
        %538 = vmatpush2.bf16.msra.mxu0 0
        %539 = vmatprep.subr.bf16.mxu0 0
        %540 = vmatpush2.bf16.msra.mxu0 0
        %541 = vmatprep.subr.bf16.mxu0 0
        %542 = vmatpush2.bf16.msra.mxu0 0
        %543 = vmatprep.subr.bf16.mxu0 0
        %544 = vmatpush2.bf16.msra.mxu0 0
        %545 = vmatprep.subr.bf16.mxu0 0
        %546 = vmatpush2.bf16.msra.mxu0 0
        %547 = vmatprep.mubr.bf16.mxu0 0
        %548 = vmatmul.mubr.bf16.gmra.mxu0 %v318
        %v549 = vpop.f32.mrf.mxu0
        %v550 = vadd.f32 0.0, %v549
        %v551 = vpop.f32.mrf.mxu0
        %v552 = vadd.f32 0.0, %v551
        %v553 = vpop.f32.mrf.mxu0
        %v554 = vpop.f32.mrf.mxu0
        %555 = vdwg.mxu0
        %556 = vmatprep.subr.bf16.mxu0 %v482
        %557 = vmatpush1.bf16.msra.mxu0 %v481
        %558 = vmatprep.subr.bf16.mxu0 %v478
        %559 = vmatpush1.bf16.msra.mxu0 %v477
        %560 = vmatprep.subr.bf16.mxu0 %v474
        %561 = vmatpush1.bf16.msra.mxu0 %v473
        %562 = vmatprep.subr.bf16.mxu0 %v470
        %563 = vmatpush1.bf16.msra.mxu0 %v469
        %564 = vmatprep.subr.bf16.mxu0 %v466
        %565 = vmatpush1.bf16.msra.mxu0 %v465
        %566 = vmatprep.subr.bf16.mxu0 %v462
        %567 = vmatpush1.bf16.msra.mxu0 %v461
        %568 = vmatprep.subr.bf16.mxu0 %v458
        %569 = vmatpush1.bf16.msra.mxu0 %v457
        %570 = vmatprep.subr.bf16.mxu0 %v454
        %571 = vmatpush1.bf16.msra.mxu0 %v453
        %572 = vmatprep.subr.bf16.mxu0 0
        %573 = vmatpush2.bf16.msra.mxu0 0
        %574 = vmatprep.subr.bf16.mxu0 0
        %575 = vmatpush2.bf16.msra.mxu0 0
        %576 = vmatprep.subr.bf16.mxu0 0
        %577 = vmatpush2.bf16.msra.mxu0 0
        %578 = vmatprep.subr.bf16.mxu0 0
        %579 = vmatpush2.bf16.msra.mxu0 0
        %580 = vmatprep.subr.bf16.mxu0 0
        %581 = vmatpush2.bf16.msra.mxu0 0
        %582 = vmatprep.subr.bf16.mxu0 0
        %583 = vmatpush2.bf16.msra.mxu0 0
        %584 = vmatprep.subr.bf16.mxu0 0
        %585 = vmatpush2.bf16.msra.mxu0 0
        %586 = vmatprep.subr.bf16.mxu0 0
        %587 = vmatpush2.bf16.msra.mxu0 0
        %588 = vmatprep.mubr.bf16.mxu0 0
        %589 = vmatmul.mubr.bf16.gmra.mxu0 %v318
        %v590 = vpop.f32.mrf.mxu0
        %v591 = vadd.f32 0.0, %v590
        %v592 = vpop.f32.mrf.mxu0
        %v593 = vadd.f32 0.0, %v592
        %v594 = vpop.f32.mrf.mxu0
        %v595 = vpop.f32.mrf.mxu0
        %596 = vdwg.mxu0
        %v597 = vadd.f32 %v319, %v550
        %v598 = vadd.f32 %v320, %v552
        %v599 = vadd.f32 %v321, %v591
        %v600 = vadd.f32 %v322, %v593
        %601 = vst [vmem:[#allocation2] sm:$0xff] %v597
        %602 = vst [vmem:[#allocation2 + $0x8] sm:$0xff] %v598
        %603 = vst [vmem:[#allocation2 + $0x10] sm:$0xff] %v599
        %604 = vst [vmem:[#allocation2 + $0x18] sm:$0xff] %v600
        %p605 = scmp.eq.s32.totalorder %s28, 1
        // Predicated region
        $region53: #{tpu_custom_call.1} parent=39 // pred_check
          %p606 = pneg %p605
        $region54: #{tpu_custom_call.1} parent=39 // pred_check_branch
          %608 = sbr.rel (%p606) target = $region56
        $region55: #{tpu_custom_call.1} parent=39 // pred_region
          %v609 = vld [vmem:[#allocation2] sm:$0xff]
          %v610 = vld [vmem:[#allocation2 + $0x8] sm:$0xff]
          %v611 = vld [vmem:[#allocation2 + $0x10] sm:$0xff]
          %v612 = vld [vmem:[#allocation2 + $0x18] sm:$0xff]
          %v613 = vld [vmem:[%s4] sm:$0xf]
          %v615 = vlaneseq
          %v616 = vshrl.u32 %v615, 7
          %v617 = vsub.s32 0, %v616
          %v618 = vrot.slane %v613, %v617
          %v619 = vlaneseq
          %v620 = vshrl.u32 %v619, 7
          %v621 = vsub.s32 1, %v620
          %v622 = vrot.slane %v613, %v621
          %v623 = vlaneseq
          %v624 = vshrl.u32 %v623, 7
          %v625 = vsub.s32 2, %v624
          %v626 = vrot.slane %v613, %v625
          %v627 = vlaneseq
          %v628 = vshrl.u32 %v627, 7
          %v629 = vsub.s32 3, %v628
          %v630 = vrot.slane %v613, %v629
          %v635 = vadd.f32 %v609, %v618
          %v636 = vadd.f32 %v610, %v622
          %v637 = vadd.f32 %v611, %v626
          %v638 = vadd.f32 %v612, %v630
          %v639 = vtanh.pop %v635
          %v640 = vtanh.pop %v636
          %v641 = vtanh.pop %v637
          %v642 = vtanh.pop %v638
          %v645 = vcombine.low %v639, %v640
          %v646 = vcombine.high %v639, %v640
          %v651 = vcombine.low %v641, %v642
          %v652 = vcombine.high %v641, %v642
          %v655 = vld [vmem:[%s2] sm:$0x1f]
          %v656 = vld [vmem:[%s306] sm:$0x3]
          %v657 = vlaneseq
          %v658 = vshrl.u32 %v657, 7
          %v659 = vsub.s32 0, %v658
          %v660 = vrot.slane %v656, %v659
          %662 = vbcast.lane.b32.xlu0 %v660, 256
          %v663 = vpop.permute.xlu0 %662
          %v664 = vlaneseq
          %v665 = vshrl.u32 %v664, 7
          %v666 = vsub.s32 1, %v665
          %v667 = vrot.slane %v656, %v666
          %669 = vbcast.lane.b32.xlu0 %v667, 256
          %v670 = vpop.permute.xlu0 %669
          %v671 = vmul.f32 %v663, %v655
          %v672 = vmul.f32 %v670, %v655
          %vm673 = vcmask 27648
          %v674 = vsel %vm673, %v671, 0.0
          %v675 = vrot.slane %v674, 4
          %v676 = vadd.f32 %v674, %v675
          %v677 = vrot.slane %v676, 2
          %v678 = vadd.f32 %v676, %v677
          %v679 = vrot.slane %v678, 1
          %v680 = vadd.f32 %v678, %v679
          %v681 = vsel %vm673, %v672, 0.0
          %v682 = vrot.slane %v681, 4
          %v683 = vadd.f32 %v681, %v682
          %v684 = vrot.slane %v683, 2
          %v685 = vadd.f32 %v683, %v684
          %v686 = vrot.slane %v685, 1
          %v687 = vadd.f32 %v685, %v686
          %v688 = vlaneseq
          %v689 = vshrl.u32 %v688, 7
          %v690 = vsub.s32 4, %v689
          %v691 = vrot.slane %v655, %v690
          %v692 = vadd.f32 %v680, %v691
          %v693 = vadd.f32 %v687, %v691
          %v694 = vtanh.pop %v692
          %v695 = vtanh.pop %v693
          %v696 = vmul.f32 %v694, 0.14285715
          %v697 = vmul.f32 %v695, 0.14285715
          %v698 = vlaneseq
          %v699 = vshrl.u32 %v698, 7
          %v700 = vsub.s32 0, %v699
          %v701 = vrot.slane %v696, %v700
          %703 = vbcast.lane.b32.xlu0 %v701, 256
          %v704 = vpop.permute.xlu0 %703
          %v705 = vlaneseq
          %v706 = vshrl.u32 %v705, 7
          %v707 = vsub.s32 0, %v706
          %v708 = vrot.slane %v697, %v707
          %710 = vbcast.lane.b32.xlu0 %v708, 256
          %v711 = vpop.permute.xlu0 %710
          %v712 = vcombine.high %v645, %v645
          %v713 = vcombine.high %v646, %v646
          %v716 = vmul.f32 %v704, %v645
          %v717 = vmul.f32 %v704, %v712
          %v718 = vmul.f32 %v711, %v646
          %v719 = vmul.f32 %v711, %v713
          %vm720 = vcmask 1043456
          %v721 = vsel %vm720, %v716, 0.0
          %v722 = vrot.slane %v721, 4
          %v723 = vadd.f32 %v721, %v722
          %v724 = vrot.slane %v723, 2
          %v725 = vadd.f32 %v723, %v724
          %v726 = vrot.slane %v725, 1
          %v727 = vadd.f32 %v725, %v726
          %v728 = vsel %vm720, %v717, 0.0
          %v729 = vrot.slane %v728, 4
          %v730 = vadd.f32 %v728, %v729
          %v731 = vrot.slane %v730, 2
          %v732 = vadd.f32 %v730, %v731
          %v733 = vrot.slane %v732, 1
          %v734 = vadd.f32 %v732, %v733
          %v735 = vsel %vm720, %v718, 0.0
          %v736 = vrot.slane %v735, 4
          %v737 = vadd.f32 %v735, %v736
          %v738 = vrot.slane %v737, 2
          %v739 = vadd.f32 %v737, %v738
          %v740 = vrot.slane %v739, 1
          %v741 = vadd.f32 %v739, %v740
          %v742 = vsel %vm720, %v719, 0.0
          %v743 = vrot.slane %v742, 4
          %v744 = vadd.f32 %v742, %v743
          %v745 = vrot.slane %v744, 2
          %v746 = vadd.f32 %v744, %v745
          %v747 = vrot.slane %v746, 1
          %v748 = vadd.f32 %v746, %v747
          %v749 = vlaneseq
          %v750 = vand.u32 %v749, 127
          %v751 = vadd.s32 %v750, 128
          %vm752 = vcmp.lt.s32.totalorder %v750, 256
          %vm753 = vcmp.lt.s32.totalorder %v751, 256
          %vm758 = vcmask 1041409
          %v759 = vsel %vm758, %v741, %v727
          %v760 = vsel %vm758, %v748, %v734
          %v763 = vsel %vm752, %v759, -1e+30
          %v764 = vsel %vm753, %v760, -1e+30
          %vm765 = vcmask 1041408
          %v766 = vsel %vm765, %v763, -inf
          %v767 = vsel %vm765, %v764, -inf
          %v768 = vmax.f32 %v766, %v767
          %769 = vmax.xlane.f32.xlu0 %v768
          %v770 = vpop.xlane.xlu0 %769
          %v771 = vsub.f32 %v763, %v770
          %v772 = vsub.f32 %v764, %v770
          %v773 = vmul.f32 %v771, 1.442695
          %v774 = vpow.pop %v773
          %v775 = vmul.f32 %v772, 1.442695
          %v776 = vpow.pop %v775
          %v777 = vsel %vm765, %v774, 0.0
          %v778 = vsel %vm765, %v776, 0.0
          %v779 = vadd.f32 %v777, %v778
          %780 = vadd.xlane.f32.xlu0 %v779
          %v781 = vpop.xlane.xlu0 %780
          %v784 = vcombine.low %v774, %v776
          %v786 = vunpack.c.l.s4 1966171168
          %v787 = vunpack.c.0.s8 %v786
          %v788 = vlaneseq
          %v789 = vshrl.u32 %v788, 7
          %v790 = vsub.s32 %v787, %v789
          %v791 = vrot.slane %v784, %v790
          %v792 = vcombine.high %v791, %v791
          %v794 = vunpack.c.l.s4 1966171168
          %v795 = vunpack.c.0.s8 %v794
          %v796 = vlaneseq
          %v797 = vshrl.u32 %v796, 7
          %v798 = vsub.s32 %v795, %v797
          %v799 = vrot.slane %v791, %v798
          %v801 = vunpack.c.l.s4 1966171168
          %v802 = vunpack.c.0.s8 %v801
          %v803 = vlaneseq
          %v804 = vshrl.u32 %v803, 7
          %v805 = vsub.s32 %v802, %v804
          %v806 = vrot.slane %v792, %v805
          %v807 = vlaneseq
          %v808 = vshrl.u32 %v807, 7
          %v809 = vsub.s32 0, %v808
          %v810 = vrot.slane %v799, %v809
          %v811 = vlaneseq
          %v812 = vshrl.u32 %v811, 7
          %v813 = vsub.s32 1, %v812
          %v814 = vrot.slane %v799, %v813
          %v815 = vlaneseq
          %v816 = vshrl.u32 %v815, 7
          %v817 = vsub.s32 0, %v816
          %v818 = vrot.slane %v806, %v817
          %v819 = vlaneseq
          %v820 = vshrl.u32 %v819, 7
          %v821 = vsub.s32 1, %v820
          %v822 = vrot.slane %v806, %v821
          %v823 = vcombine.low %v810, %v814
          %v824 = vcombine.low %v818, %v822
          %v827 = vmul.f32 %v651, %v823
          %v828 = vmul.f32 %v652, %v824
          %v831 = vcombine.high %v827, %v827
          %v832 = vcombine.high %v828, %v828
          %v835 = vsel %vm720, %v827, 0.0
          %v836 = vsel %vm720, %v831, 0.0
          %v837 = vadd.f32 %v835, %v836
          %838 = vadd.xlane.f32.xlu0 %v837
          %v839 = vpop.xlane.xlu0 %838
          %v840 = vsel %vm720, %v828, 0.0
          %v841 = vsel %vm720, %v832, 0.0
          %v842 = vadd.f32 %v840, %v841
          %843 = vadd.xlane.f32.xlu0 %v842
          %v844 = vpop.xlane.xlu0 %843
          %v845 = vrcp.pop %v781
          %v847 = vlaneseq
          %v848 = vshrl.u32 %v847, 7
          %v849 = vsub.s32 0, %v848
          %v850 = vrot.slane %v845, %v849
          %v851 = vlaneseq
          %v852 = vshrl.u32 %v851, 7
          %v853 = vsub.s32 1, %v852
          %v854 = vrot.slane %v845, %v853
          %v857 = vmul.f32 %v839, %v850
          %v858 = vmul.f32 %v844, %v854
          %861 = vset.pattern.permute.xlu0 0
          %862 = vperm.xlu0 %861, %v857
          %v863 = vpop.permute.xlu0 %862
          %864 = vset.pattern.permute.xlu0 0
          %865 = vperm.xlu0 %864, %v858
          %v866 = vpop.permute.xlu0 %865
          %v867 = vlaneseq
          %v868 = vshrl.u32 %v867, 7
          %v869 = vsub.s32 %v750, %v868
          %v870 = vrot.slane %v863, %v869
          %v871 = vlaneseq
          %v872 = vshrl.u32 %v871, 7
          %v873 = vsub.s32 %v750, %v872
          %v874 = vrot.slane %v866, %v873
          %v875 = vsel %vm758, %v874, %v870
          %vm877 = vcmask 25600
          %878 = vst.msk [vmem:[#allocation8] sm:$0x3] %vm877, %v875
        $region56: #{tpu_custom_call.1} parent=39 // pred_fallthru
          _
        // Predicated region
        $region57: #{tpu_custom_call.1} parent=39 // pred_check
          %p879 = pneg %p175
        $region58: #{tpu_custom_call.1} parent=39 // pred_check_branch
          %881 = sbr.rel (%p879) target = $region60
        $region59: #{tpu_custom_call.1} parent=39 // pred_region
          %s883 = ssub.s32 32, 32
          %884 = vsyncadd [#allocation5], %s883
          %s885 = smul.addr %s27, 32
          %s886 = scalar_lea.hbm %s5, %s885
          %s888 = sshll.u32 [#allocation8], 4
          %s889 = int_to_ptr.vmem [resolvable:$true] %s888
          %891 = dma.vmem_to_hbm [thread:$0]  %s889, 32, %s886, [#allocation5]
        $region60: #{tpu_custom_call.1} parent=39 // pred_fallthru
          _
        // Predicated region
        $region61: #{tpu_custom_call.1} parent=39 // pred_check
          %p892 = pneg %p175
        $region62: #{tpu_custom_call.1} parent=39 // pred_check_branch
          %894 = sbr.rel (%p892) target = $region64
        $region63: #{tpu_custom_call.1} parent=39 // pred_region
          %895 = dma.done [#allocation5], 32
        $region64: #{tpu_custom_call.1} parent=39 // pred_fallthru
          _
      $region40: #{tpu_custom_call.1} parent=5 // pred_fallthru
        _
      %p896 = scmp.le.s32.totalorder 2, %s18
      // Predicated region
      $region65: #{tpu_custom_call.1} parent=5 // pred_check
        %p897 = pneg %p896
      $region66: #{tpu_custom_call.1} parent=5 // pred_check_branch
        %899 = sbr.rel (%p897) target = $region68
      $region67: #{tpu_custom_call.1} parent=5 // pred_region
        %s900 = ssub.s32 %s18, 2
      $region68: #{tpu_custom_call.1} parent=5 // pred_fallthru
        _
    $region6: #{tpu_custom_call.1} parent=1 // loop_footer
      %s22 = sadd.s32 1, %s18
    $region7: #{tpu_custom_call.1} parent=1 // loop_footer_branch
      %17 = sbr.rel target = $region3
    $region8: #{tpu_custom_call.1} parent=1 // loop_exit
      _
    %901 = vsyncpa [#allocation4], 1
    %s902 = scalar_lea.sflag [#allocation4], 1
    %903 = vsyncpa %s902, 1
    %904 = vsyncpa [#allocation7], 1
    %s905 = scalar_lea.sflag [#allocation7], 1
    %906 = vsyncpa %s905, 1
    %907 = vsyncpa [#allocation5], 1
    %s908 = scalar_lea.sflag [#allocation5], 1
    %909 = vsyncpa %s908, 1

</llo_original>
